<compile_context>
chip_gen: v6e
topology: v6e:2x2x1
jax: 0.10.0
libtpu: 0.0.40
codegen_flags: <defaults>
</compile_context>

<pallas_src>
import functools

import jax
import jax.numpy as jnp
from jax.experimental import pallas as pl
from jax.experimental.pallas import tpu as pltpu

_LANES = 128
_TARGET_ROW_TILE = 2048  # ~1 MiB per f32 input block; 4 MiB total double-buffered.


def _smooth_l1_partial_kernel(x_ref, y_ref, o_ref, *, row_tile, rows_valid, need_mask):
    """One grid step: SmoothL1 over a (row_tile, 128) tile -> (1, 128) partial sum."""
    x = x_ref[...].astype(jnp.float32)
    y = y_ref[...].astype(jnp.float32)
    d = x - y
    ad = jnp.abs(d)
    # Branch-free Huber / SmoothL1 with beta = 1 (PyTorch default):
    #   t = min(|d|, 1);  loss = 0.5*t^2 + (|d| - t)
    t = jnp.minimum(ad, 1.0)
    loss = 0.5 * t * t + (ad - t)

    if need_mask:
        # The last grid step may read past the end of the (rows, 128) array;
        # zero the loss contribution of out-of-range rows (not just the inputs).
        i = pl.program_id(0)
        row_ids = jax.lax.broadcasted_iota(jnp.int32, (row_tile, _LANES), 0)
        valid = (i * row_tile + row_ids) < rows_valid
        loss = jnp.where(valid, loss, 0.0)

    # Row reduction = VPU vreg adds + a single sublane reduce; lanes stay dense.
    o_ref[...] = jnp.sum(loss, axis=0, keepdims=True).reshape(1, 1, _LANES)


def lhue_loss(im_h, R_h):
    """SmoothL1Loss (mean reduction, beta=1) between im_h and R_h via Pallas."""
    assert im_h.shape == R_h.shape, "SmoothL1Loss requires matching shapes"
    n_elems = im_h.size

    # Keep native dtype (bf16 inputs stream half the bytes); flatten lane-dense.
    x = im_h.reshape(-1)
    y = R_h.reshape(-1)

    # Pad only when n is not a multiple of 128 (at most 127 zeros; zero diff
    # contributes zero loss and we divide by the true element count).
    rem = n_elems % _LANES
    if rem:
        pad = _LANES - rem
        x = jnp.pad(x, (0, pad))
        y = jnp.pad(y, (0, pad))
    rows = x.size // _LANES
    x2 = x.reshape(rows, _LANES)
    y2 = y.reshape(rows, _LANES)

    # Minimum sublane multiple for the dtype (f32: 8, bf16/f16: 16, int8/fp8: 32).
    itemsize = jnp.dtype(x2.dtype).itemsize
    sub = {4: 8, 2: 16, 1: 32}.get(itemsize, 8)
    if rows < sub:
        # Tiny input: pad rows up to one aligned tile (a few KiB at most).
        x2 = jnp.pad(x2, ((0, sub - rows), (0, 0)))
        y2 = jnp.pad(y2, ((0, sub - rows), (0, 0)))
        rows = sub

    # Largest aligned row tile <= rows, capped at the target size.
    row_tile = min(_TARGET_ROW_TILE, (rows // sub) * sub)
    num_tiles = pl.cdiv(rows, row_tile)
    need_mask = (rows % row_tile) != 0

    kernel = functools.partial(
        _smooth_l1_partial_kernel,
        row_tile=row_tile,
        rows_valid=rows,
        need_mask=need_mask,
    )

    partials = pl.pallas_call(
        kernel,
        out_shape=jax.ShapeDtypeStruct((num_tiles, 1, _LANES), jnp.float32),
        grid_spec=pltpu.PrefetchScalarGridSpec(
            num_scalar_prefetch=0,
            grid=(num_tiles,),
            in_specs=[
                pl.BlockSpec((row_tile, _LANES), lambda i: (i, 0)),
                pl.BlockSpec((row_tile, _LANES), lambda i: (i, 0)),
            ],
            out_specs=pl.BlockSpec((1, 1, _LANES), lambda i: (i, 0, 0)),
        ),
        compiler_params=pltpu.CompilerParams(
            dimension_semantics=("parallel",),
        ),
    )(x2, y2)

    # Final reduction over num_tiles * 128 partial sums is tiny; do it in XLA.
    return jnp.sum(partials) * (1.0 / float(n_elems))


def _reference_smooth_l1(x, y):
    d = x.astype(jnp.float32) - y.astype(jnp.float32)
    ad = jnp.abs(d)
    return jnp.mean(jnp.where(ad < 1.0, 0.5 * d * d, ad - 0.5))


if __name__ == "__main__":
    key = jax.random.PRNGKey(0)
    k1, k2 = jax.random.split(key)

    # NCHW image tensors, small shapes consistent with the module.
    im_h = jax.random.normal(k1, (2, 4, 16, 16), dtype=jnp.float32)
    R_h = jax.random.normal(k2, (2, 4, 16, 16), dtype=jnp.float32)

    loss = lhue_loss(im_h, R_h)
    jax.block_until_ready(loss)
    ref = _reference_smooth_l1(im_h, R_h)
    assert jnp.allclose(loss, ref, rtol=1e-5, atol=1e-6), (loss, ref)

    # Also exercise the unaligned / masked-tail path.
    k3, k4 = jax.random.split(k2)
    a = jax.random.normal(k3, (2, 3, 17, 17), dtype=jnp.float32)
    b = jax.random.normal(k4, (2, 3, 17, 17), dtype=jnp.float32)
    loss2 = lhue_loss(a, b)
    jax.block_until_ready(loss2)
    ref2 = _reference_smooth_l1(a, b)
    assert jnp.allclose(loss2, ref2, rtol=1e-5, atol=1e-6), (loss2, ref2)

    print("KERNEL_OK")
</pallas_src>

<mosaic_0001>
module attributes {stable_mosaic.version = 11 : i64} {
  func.func @_smooth_l1_partial_kernel(%arg0: i32, %arg1: memref<16x128xf32, #tpu.memory_space<vmem>>, %arg2: memref<16x128xf32, #tpu.memory_space<vmem>>, %arg3: memref<1x1x128xf32, #tpu.memory_space<vmem>>) attributes {dimension_semantics = [#tpu.dimension_semantics<parallel>], iteration_bounds = array<i64: 1>, scalar_prefetch = 0 : i64, scratch_operands = 0 : i64, tpu.core_type = #tpu.core_type<tc>, window_params = [{transform_indices = @transform_0, window_bounds = array<i64: 16, 128>}, {transform_indices = @transform_1, window_bounds = array<i64: 16, 128>}, {transform_indices = @transform_2, window_bounds = array<i64: 1, 1, 128>}]} {
    %c0 = arith.constant 0 : index
    %c0_0 = arith.constant 0 : index
    %0 = vector.load %arg1[%c0, %c0_0] : memref<16x128xf32, #tpu.memory_space<vmem>>, vector<16x128xf32>
    %c0_1 = arith.constant 0 : index
    %c0_2 = arith.constant 0 : index
    %1 = vector.load %arg2[%c0_1, %c0_2] : memref<16x128xf32, #tpu.memory_space<vmem>>, vector<16x128xf32>
    %2 = arith.subf %0, %1 : vector<16x128xf32>
    %3 = math.absf %2 : vector<16x128xf32>
    %cst = arith.constant 1.000000e+00 : f32
    %4 = vector.broadcast %cst : f32 to vector<16x128xf32>
    %5 = arith.minimumf %3, %4 : vector<16x128xf32>
    %cst_3 = arith.constant 5.000000e-01 : f32
    %6 = vector.broadcast %cst_3 : f32 to vector<16x128xf32>
    %7 = arith.mulf %6, %5 : vector<16x128xf32>
    %8 = arith.mulf %7, %5 : vector<16x128xf32>
    %9 = arith.subf %3, %5 : vector<16x128xf32>
    %10 = arith.addf %8, %9 : vector<16x128xf32>
    %cst_4 = arith.constant dense<0.000000e+00> : vector<128xf32>
    %11 = vector.multi_reduction <add>, %10, %cst_4 [0] : vector<16x128xf32> to vector<128xf32>
    %12 = vector.shape_cast %11 : vector<128xf32> to vector<1x128xf32>
    %13 = vector.shape_cast %12 : vector<1x128xf32> to vector<1x1x128xf32>
    %c0_5 = arith.constant 0 : index
    %c0_6 = arith.constant 0 : index
    %c0_7 = arith.constant 0 : index
    %14 = vector.load %arg3[%c0_5, %c0_6, %c0_7] : memref<1x1x128xf32, #tpu.memory_space<vmem>>, vector<1x1x128xf32>
    tpu.vector_store %arg3[%c0_5, %c0_6, %c0_7], %13 {strides = array<i32>} : memref<1x1x128xf32, #tpu.memory_space<vmem>>, vector<1x1x128xf32>,
    return
  }
  func.func @transform_0(%arg0: i32) -> (i32, i32) {
    %c0_i32 = arith.constant 0 : i32
    %c0_i32_0 = arith.constant 0 : i32
    return %arg0, %c0_i32 : i32, i32
  }
  func.func @transform_1(%arg0: i32) -> (i32, i32) {
    %c0_i32 = arith.constant 0 : i32
    %c0_i32_0 = arith.constant 0 : i32
    return %arg0, %c0_i32 : i32, i32
  }
  func.func @transform_2(%arg0: i32) -> (i32, i32, i32) {
    %c0_i32 = arith.constant 0 : i32
    %c0_i32_0 = arith.constant 0 : i32
    %c0_i32_1 = arith.constant 0 : i32
    return %arg0, %c0_i32, %c0_i32_0 : i32, i32, i32
  }
}

</mosaic_0001>

<llo_original>
// kernel: tpu_custom_call.1
$region0: #{tpu_custom_call.1}
  #allocation0 [shape = 'u32[]', space=smem, size = 0x4, offset = 0x4, fixed_abs, tag = 'smem constant byte address 0x4 - core index']
  #allocation1 [shape = 'u32[144,128]{1,0:T(1,128)}', space=vmem, size = 0x12000, scoped, tag = 'internal scratch']
  %s0 = inlined_call_operand.hbm [shape: f32[16,128], index: 0, kind: input, shape index: {}]
  %s1 = inlined_call_operand.hbm [shape: f32[16,128], index: 1, kind: input, shape index: {}]
  %s2 = inlined_call_operand.hbm [shape: f32[1,1,128], index: 2, kind: output, shape index: {}]
  %s3 = sld [smem:[#allocation0]]
  $region26: #{tpu_custom_call.1} parent=0
    _
  %s5 = ssub.s32 1, %s3
  %s6 = scalar_select 0, %s5, %s3
  $region1: #{tpu_custom_call.1} parent=0
    #allocation2 [shape = 'u8[8192]{0}', space=vmem, size = 0x2000, scoped, tag = 'input window, operand 0, single buffered']
    #allocation3 [shape = 's32[1]{0}', space=sflag, size = 0x4, scoped, tag = 'scoped memory for tpu_custom_call.1']
    #allocation4 [shape = 's32[1]{0}', space=sflag, size = 0x4, scoped, tag = 'scoped memory for tpu_custom_call.1']
    #allocation5 [shape = 'u8[8192]{0}', space=vmem, size = 0x2000, scoped, tag = 'input window, operand 1, single buffered']
    #allocation6 [shape = 's32[1]{0}', space=sflag, size = 0x4, scoped, tag = 'scoped memory for tpu_custom_call.1']
    #allocation7 [shape = 'u8[512]{0}', space=vmem, size = 0x400, scoped, tag = 'output window, operand 0, single buffered']
    %7 = vsyncpa [#allocation3], 0
    %8 = vsyncpa [#allocation6], 0
    %9 = vsyncpa [#allocation4], 0
    // Predicated region
    $region2: #{tpu_custom_call.1} parent=1 // pred_check
      _
    $region3: #{tpu_custom_call.1} parent=1 // pred_check_branch
      %11 = sbr.rel (0) target = $region5
    $region4: #{tpu_custom_call.1} parent=1 // pred_region
      %s13 = ssub.s32 256, 256
      %14 = vsyncadd [#allocation3], %s13
      %s15 = sshll.u32 [#allocation2], 4
      %s16 = int_to_ptr.vmem [resolvable:$true] %s15
      %21 = dma.hbm_to_vmem [thread:$0]  %s0, 256, %s16, [#allocation3], 128, 128, 8
    $region5: #{tpu_custom_call.1} parent=1 // pred_fallthru
      _
    // Predicated region
    $region6: #{tpu_custom_call.1} parent=1 // pred_check
      _
    $region7: #{tpu_custom_call.1} parent=1 // pred_check_branch
      %23 = sbr.rel (0) target = $region9
    $region8: #{tpu_custom_call.1} parent=1 // pred_region
      %s25 = ssub.s32 256, 256
      %26 = vsyncadd [#allocation6], %s25
      %s27 = sshll.u32 [#allocation5], 4
      %s28 = int_to_ptr.vmem [resolvable:$true] %s27
      %33 = dma.hbm_to_vmem [thread:$0]  %s1, 256, %s28, [#allocation6], 128, 128, 8
    $region9: #{tpu_custom_call.1} parent=1 // pred_fallthru
      _
    // Predicated region
    $region10: #{tpu_custom_call.1} parent=1 // pred_check
      _
    $region11: #{tpu_custom_call.1} parent=1 // pred_check_branch
      %35 = sbr.rel (0) target = $region13
    $region12: #{tpu_custom_call.1} parent=1 // pred_region
      %36 = dma.done [#allocation3], 256
    $region13: #{tpu_custom_call.1} parent=1 // pred_fallthru
      _
    // Predicated region
    $region14: #{tpu_custom_call.1} parent=1 // pred_check
      _
    $region15: #{tpu_custom_call.1} parent=1 // pred_check_branch
      %38 = sbr.rel (0) target = $region17
    $region16: #{tpu_custom_call.1} parent=1 // pred_region
      %39 = dma.done [#allocation6], 256
    $region17: #{tpu_custom_call.1} parent=1 // pred_fallthru
      _
    %v40 = vld [vmem:[#allocation2] sm:$0xff]
    %v41 = vld [vmem:[#allocation2 + $0x8] sm:$0xff]
    %v42 = vld [vmem:[#allocation5] sm:$0xff]
    %v43 = vld [vmem:[#allocation5 + $0x8] sm:$0xff]
    %v44 = vsub.f32 %v40, %v42
    %v45 = vsub.f32 %v41, %v43
    %v46 = vand.u32 2147483647, %v44
    %v47 = vand.u32 2147483647, %v45
    %v48 = vmin.f32 %v46, 1.0
    %v49 = vmin.f32 %v47, 1.0
    %v50 = vmul.f32 %v48, 0.5
    %v51 = vmul.f32 %v49, 0.5
    %v52 = vmul.f32 %v50, %v48
    %v53 = vmul.f32 %v51, %v49
    %v54 = vsub.f32 %v46, %v48
    %v55 = vsub.f32 %v47, %v49
    %v56 = vadd.f32 %v52, %v54
    %v57 = vadd.f32 %v53, %v55
    %v58 = vadd.f32 %v56, %v57
    %v59 = vrot.slane %v58, 4
    %v60 = vadd.f32 %v58, %v59
    %v61 = vrot.slane %v60, 2
    %v62 = vadd.f32 %v60, %v61
    %v63 = vrot.slane %v62, 1
    %v64 = vadd.f32 %v62, %v63
    %65 = vst [vmem:[#allocation7] sm:$0x1] %v64
    // Predicated region
    $region18: #{tpu_custom_call.1} parent=1 // pred_check
      _
    $region19: #{tpu_custom_call.1} parent=1 // pred_check_branch
      %67 = sbr.rel (0) target = $region21
    $region20: #{tpu_custom_call.1} parent=1 // pred_region
      %s69 = ssub.s32 16, 16
      %70 = vsyncadd [#allocation4], %s69
      %s72 = sshll.u32 [#allocation7], 4
      %s73 = int_to_ptr.vmem [resolvable:$true] %s72
      %75 = dma.vmem_to_hbm [thread:$0]  %s73, 16, %s2, [#allocation4]
    $region21: #{tpu_custom_call.1} parent=1 // pred_fallthru
      _
    // Predicated region
    $region22: #{tpu_custom_call.1} parent=1 // pred_check
      _
    $region23: #{tpu_custom_call.1} parent=1 // pred_check_branch
      %77 = sbr.rel (0) target = $region25
    $region24: #{tpu_custom_call.1} parent=1 // pred_region
      %78 = dma.done [#allocation4], 16
    $region25: #{tpu_custom_call.1} parent=1 // pred_fallthru
      _
    %79 = vsyncpa [#allocation3], 1
    %80 = vsyncpa [#allocation6], 1
    %81 = vsyncpa [#allocation4], 1

</llo_original>
